<compile_context>
chip_gen: v7x
topology: tpu7x:2x2x1
jax: 0.10.0
libtpu: 0.0.40
codegen_flags: <defaults>
</compile_context>

<pallas_src>
import jax
import jax.numpy as jnp
from jax.experimental import pallas as pl
from jax.experimental.pallas import tpu as pltpu


def _round_up(x, m):
    return (x + m - 1) // m * m


def _mlp1_kernel(x_ref, wt_ref, b_ref, o_ref):
    # x_ref : (TB, IN)       f32  (batch tile, pipelined)
    # wt_ref: (IN, OUT_pad)  bf16 (grid-invariant -> VMEM-resident)
    # b_ref : (1, OUT_pad)   f32  (grid-invariant)
    # o_ref : (TB, OUT_pad)  f32/bf16 (lane-dense: OUT_pad % 128 == 0)
    x = x_ref[...].astype(jnp.bfloat16)          # bf16 MXU operands, f32 accumulation
    y = jnp.dot(x, wt_ref[...], preferred_element_type=jnp.float32) + b_ref[...]

    # mish(y) = y * tanh(softplus(y)), single-exp formulation (f32 on VPU/EUP).
    e = jnp.exp(-jnp.abs(y))                     # e in (0, 1] -> no overflow anywhere
    t = e * (e + 2.0)
    pos = y >= 0.0
    num = jnp.where(pos, 2.0 * e + 1.0, t)
    den = jnp.where(pos, 2.0 * e * e + 2.0 * e + 1.0, t + 2.0)
    o_ref[...] = (y * num * pl.reciprocal(den, approx=True)).astype(o_ref.dtype)


def prepare_mlp1_params(weight, bias, lane_multiple=128):
    """One-time (init-time) parameter prep, NOT per forward call:
    pad OUT to a lane-dense multiple of 128, pre-transpose to (IN, OUT_pad), and cast
    the weight to bf16 for the MXU.  Returns (wt, b2, out_features).

    Note: for OUT << 128 (e.g. 16) the lane pad writes 8x the useful output bytes; if a
    profile shows the padded writeback dominating, set lane_multiple=1 (full-dim output
    block, masked vst.msk stores) and benchmark both."""
    OUT, IN = weight.shape
    OUT_pad = _round_up(OUT, lane_multiple)
    wt = jnp.pad(weight.T.astype(jnp.bfloat16), ((0, 0), (0, OUT_pad - OUT)))
    b2 = jnp.pad(bias.astype(jnp.float32), (0, OUT_pad - OUT)).reshape(1, OUT_pad)
    return wt, b2, OUT


def _vmem_budget_bytes():
    """<= 75% of physical per-core VMEM; conservative 48 MiB if the query fails."""
    try:
        cap = int(pltpu.get_tpu_info().vmem_capacity_bytes)
    except Exception:
        cap = 64 << 20   # v7x per-TC physical (v5e/v6e have 128 MiB)
    return cap * 3 // 4


def _choose_batch_tile(B, IN, OUT_pad, out_bytes, budget):
    """Pick the batch tile: as big as the VMEM budget allows (up to 1024 rows),
    multiple of 8, MXU-M aligned for large tiles, >= 2 grid steps when possible."""
    B8 = _round_up(B, 8)
    resident = 2 * (IN * OUT_pad * 2 + OUT_pad * 4)       # weight+bias, worst-case 2 bufs
    tile_budget = max(1 << 20, budget - resident - (2 << 20))
    per_row = 2 * (IN * 4 + OUT_pad * out_bytes)          # double-buffered x + out tiles
    cap = max(8, (tile_budget // per_row) // 8 * 8)
    TB = min(1024, B8, cap)
    # Prefer >= 2 grid steps so v7x megacore shards the batch across both TensorCores.
    if TB >= B8 and B8 >= 16:
        TB = _round_up((B8 + 1) // 2, 8)
    # Align large tiles to MXU M granularity (256 on v6e/v7x; also a 128-multiple for v5e).
    if TB >= 512:
        TB = TB // 256 * 256
    elif TB >= 256:
        TB = TB // 128 * 128
    if TB > B:          # tiny batch: use the full dim (block dim == array dim is legal)
        TB = B
    return TB


def mlp1_forward(x, wt, b2, out_features, out_dtype=jnp.float32):
    """x: (B, IN) f32, wt: (IN, OUT_pad) bf16, b2: (1, OUT_pad) f32.
    Returns (B, out_features) in out_dtype (f32 default; bf16 halves HBM writeback)."""
    B, IN = x.shape
    IN_w, OUT_pad = wt.shape
    assert IN == IN_w, "in_features mismatch (LazyLinear inferred IN from x)"

    out_bytes = jnp.dtype(out_dtype).itemsize
    budget = _vmem_budget_bytes()
    TB = _choose_batch_tile(B, IN, OUT_pad, out_bytes, budget)
    grid = (pl.cdiv(B, TB),)

    # Real-footprint VMEM limit: double-buffered x/out tiles + resident weight/bias
    # (counted twice to also cover the non-single-buffered fallback), + 25% + 1 MiB
    # margin for Mosaic internal scratch.  Never exceeds the per-generation budget.
    usage = (2 * TB * IN * 4 + 2 * TB * OUT_pad * out_bytes
             + 2 * IN * OUT_pad * 2 + 2 * OUT_pad * 4)
    vmem_limit = int(min(budget, max(usage + usage // 4 + (1 << 20), 4 << 20)))

    def build(single_buffer_resident):
        resident_mode = pl.Buffered(1) if single_buffer_resident else None
        return pl.pallas_call(
            _mlp1_kernel,
            out_shape=jax.ShapeDtypeStruct((B, OUT_pad), out_dtype),
            grid_spec=pltpu.PrefetchScalarGridSpec(
                num_scalar_prefetch=0,
                grid=grid,
                in_specs=[
                    pl.BlockSpec((TB, IN), lambda i: (i, 0)),        # batch tile
                    pl.BlockSpec((IN, OUT_pad), lambda i: (0, 0),
                                 pipeline_mode=resident_mode),       # resident weight
                    pl.BlockSpec((1, OUT_pad), lambda i: (0, 0),
                                 pipeline_mode=resident_mode),       # resident bias
                ],
                out_specs=pl.BlockSpec((TB, OUT_pad), lambda i: (i, 0)),
            ),
            compiler_params=pltpu.CompilerParams(
                dimension_semantics=("parallel",),
                vmem_limit_bytes=vmem_limit,
            ),
        )

    try:
        out = build(True)(x, wt, b2)
    except Exception:
        # pipeline_mode=pl.Buffered(1) not accepted by this JAX/Mosaic build — fall back
        # to default pipelining for the grid-invariant operands (VMEM sizing covers it).
        out = build(False)(x, wt, b2)

    # Strip only the output-lane padding (no batch padding/slicing pass).  Wrap the whole
    # forward in jax.jit at the call site so this slice fuses into the consumer.
    return out if OUT_pad == out_features else out[:, :out_features]


if __name__ == "__main__":
    # Small shapes implied by the forward: x (batch, in_features), LazyLinear -> output_dim
    B, IN, OUT = 8, 32, 16

    key = jax.random.PRNGKey(0)
    kx, kw, kb = jax.random.split(key, 3)
    x = jax.random.normal(kx, (B, IN), dtype=jnp.float32)
    weight = jax.random.normal(kw, (OUT, IN), dtype=jnp.float32) * 0.1   # PyTorch (OUT, IN)
    bias = jax.random.normal(kb, (OUT,), dtype=jnp.float32) * 0.1

    wt, b2, out_features = prepare_mlp1_params(weight, bias)

    out = mlp1_forward(x, wt, b2, out_features)
    jax.block_until_ready(out)

    # Pure-JAX f32 reference of linear + mish.  Kernel uses bf16 MXU operands and an
    # approximate EUP reciprocal in the epilogue -> loosened tolerance.
    y_ref = x @ weight.T + bias
    ref = y_ref * jnp.tanh(jax.nn.softplus(y_ref))
    assert out.shape == ref.shape, (out.shape, ref.shape)
    err = float(jnp.max(jnp.abs(out - ref)))
    assert jnp.allclose(out, ref, atol=1e-2, rtol=1e-2), err

    print("KERNEL_OK")
</pallas_src>

<mosaic_0001>
module attributes {stable_mosaic.version = 11 : i64} {
  func.func @_mlp1_kernel(%arg0: i32, %arg1: memref<8x32xf32, #tpu.memory_space<vmem>>, %arg2: memref<32x128xbf16, #tpu.memory_space<vmem>>, %arg3: memref<1x128xf32, #tpu.memory_space<vmem>>, %arg4: memref<8x128xf32, #tpu.memory_space<vmem>>) attributes {dimension_semantics = [#tpu.dimension_semantics<parallel>], iteration_bounds = array<i64: 1>, scalar_prefetch = 0 : i64, scratch_operands = 0 : i64, tpu.core_type = #tpu.core_type<tc>, window_params = [{transform_indices = @transform_0, window_bounds = array<i64: 8, 32>}, {pipeline_mode = #tpu.pipeline_mode<synchronous>, transform_indices = @transform_1, window_bounds = array<i64: 32, 128>}, {pipeline_mode = #tpu.pipeline_mode<synchronous>, transform_indices = @transform_2, window_bounds = array<i64: 1, 128>}, {transform_indices = @transform_3, window_bounds = array<i64: 8, 128>}]} {
    %c0 = arith.constant 0 : index
    %c0_0 = arith.constant 0 : index
    %0 = vector.load %arg1[%c0, %c0_0] : memref<8x32xf32, #tpu.memory_space<vmem>>, vector<8x32xf32>
    %1 = arith.truncf %0 : vector<8x32xf32> to vector<8x32xbf16>
    %c0_1 = arith.constant 0 : index
    %c0_2 = arith.constant 0 : index
    %2 = vector.load %arg2[%c0_1, %c0_2] : memref<32x128xbf16, #tpu.memory_space<vmem>>, vector<32x128xbf16>
    %cst = arith.constant dense<0.000000e+00> : vector<8x128xf32>
    %3 = tpu.matmul %1, %2, %cst {dimension_numbers = #tpu.dot_dimension_numbers<[1], [0], [0], [1], [0, 0, 1, 1], [], []>} : vector<8x32xbf16>, vector<32x128xbf16>, vector<8x128xf32> -> vector<8x128xf32>
    %c0_3 = arith.constant 0 : index
    %c0_4 = arith.constant 0 : index
    %4 = vector.load %arg3[%c0_3, %c0_4] : memref<1x128xf32, #tpu.memory_space<vmem>>, vector<1x128xf32>
    %5 = vector.broadcast %4 : vector<1x128xf32> to vector<8x128xf32>
    %6 = arith.addf %3, %5 : vector<8x128xf32>
    %7 = math.absf %6 : vector<8x128xf32>
    %cst_5 = arith.constant 0.000000e+00 : f32
    %8 = vector.broadcast %cst_5 : f32 to vector<8x128xf32>
    %9 = arith.subf %8, %7 : vector<8x128xf32>
    %10 = math.exp %9 : vector<8x128xf32>
    %cst_6 = arith.constant 2.000000e+00 : f32
    %11 = vector.broadcast %cst_6 : f32 to vector<8x128xf32>
    %12 = arith.addf %10, %11 : vector<8x128xf32>
    %13 = arith.mulf %10, %12 : vector<8x128xf32>
    %cst_7 = arith.constant 0.000000e+00 : f32
    %14 = vector.broadcast %cst_7 : f32 to vector<8x128xf32>
    %15 = arith.cmpf oge, %6, %14 : vector<8x128xf32>
    %cst_8 = arith.constant 2.000000e+00 : f32
    %16 = vector.broadcast %cst_8 : f32 to vector<8x128xf32>
    %17 = arith.mulf %16, %10 : vector<8x128xf32>
    %cst_9 = arith.constant 1.000000e+00 : f32
    %18 = vector.broadcast %cst_9 : f32 to vector<8x128xf32>
    %19 = arith.addf %17, %18 : vector<8x128xf32>
    %20 = arith.select %15, %19, %13 : vector<8x128xi1>, vector<8x128xf32>
    %cst_10 = arith.constant 2.000000e+00 : f32
    %21 = vector.broadcast %cst_10 : f32 to vector<8x128xf32>
    %22 = arith.mulf %21, %10 : vector<8x128xf32>
    %23 = arith.mulf %22, %10 : vector<8x128xf32>
    %cst_11 = arith.constant 2.000000e+00 : f32
    %24 = vector.broadcast %cst_11 : f32 to vector<8x128xf32>
    %25 = arith.mulf %24, %10 : vector<8x128xf32>
    %26 = arith.addf %23, %25 : vector<8x128xf32>
    %cst_12 = arith.constant 1.000000e+00 : f32
    %27 = vector.broadcast %cst_12 : f32 to vector<8x128xf32>
    %28 = arith.addf %26, %27 : vector<8x128xf32>
    %cst_13 = arith.constant 2.000000e+00 : f32
    %29 = vector.broadcast %cst_13 : f32 to vector<8x128xf32>
    %30 = arith.addf %13, %29 : vector<8x128xf32>
    %31 = arith.select %15, %28, %30 : vector<8x128xi1>, vector<8x128xf32>
    %32 = arith.mulf %6, %20 : vector<8x128xf32>
    %33 = tpu.reciprocal %31 {approx = true} : vector<8x128xf32> -> vector<8x128xf32>
    %34 = arith.mulf %32, %33 : vector<8x128xf32>
    %c0_14 = arith.constant 0 : index
    %c0_15 = arith.constant 0 : index
    %35 = vector.load %arg4[%c0_14, %c0_15] : memref<8x128xf32, #tpu.memory_space<vmem>>, vector<8x128xf32>
    tpu.vector_store %arg4[%c0_14, %c0_15], %34 {strides = array<i32>} : memref<8x128xf32, #tpu.memory_space<vmem>>, vector<8x128xf32>,
    return
  }
  func.func @transform_0(%arg0: i32) -> (i32, i32) {
    %c0_i32 = arith.constant 0 : i32
    %c0_i32_0 = arith.constant 0 : i32
    return %arg0, %c0_i32 : i32, i32
  }
  func.func @transform_1(%arg0: i32) -> (i32, i32) {
    %c0_i32 = arith.constant 0 : i32
    %c0_i32_0 = arith.constant 0 : i32
    %c0_i32_1 = arith.constant 0 : i32
    return %c0_i32, %c0_i32_0 : i32, i32
  }
  func.func @transform_2(%arg0: i32) -> (i32, i32) {
    %c0_i32 = arith.constant 0 : i32
    %c0_i32_0 = arith.constant 0 : i32
    %c0_i32_1 = arith.constant 0 : i32
    return %c0_i32, %c0_i32_0 : i32, i32
  }
  func.func @transform_3(%arg0: i32) -> (i32, i32) {
    %c0_i32 = arith.constant 0 : i32
    %c0_i32_0 = arith.constant 0 : i32
    return %arg0, %c0_i32 : i32, i32
  }
}

module attributes {stable_mosaic.version = 11 : i64} {
  func.func @_mlp1_kernel(%arg0: i32, %arg1: memref<8x32xf32, #tpu.memory_space<vmem>>, %arg2: memref<32x128xbf16, #tpu.memory_space<vmem>>, %arg3: memref<1x128xf32, #tpu.memory_space<vmem>>, %arg4: memref<8x128xf32, #tpu.memory_space<vmem>>) attributes {dimension_semantics = [#tpu.dimension_semantics<parallel>], iteration_bounds = array<i64: 1>, scalar_prefetch = 0 : i64, scratch_operands = 0 : i64, tpu.core_type = #tpu.core_type<tc>, window_params = [{transform_indices = @transform_0, window_bounds = array<i64: 8, 32>}, {pipeline_mode = #tpu.pipeline_mode<synchronous>, transform_indices = @transform_1, window_bounds = array<i64: 32, 128>}, {pipeline_mode = #tpu.pipeline_mode<synchronous>, transform_indices = @transform_2, window_bounds = array<i64: 1, 128>}, {transform_indices = @transform_3, window_bounds = array<i64: 8, 128>}]} {
    %c0 = arith.constant 0 : index
    %c0_0 = arith.constant 0 : index
    %0 = vector.load %arg1[%c0, %c0_0] : memref<8x32xf32, #tpu.memory_space<vmem>>, vector<8x32xf32>
    %1 = arith.truncf %0 : vector<8x32xf32> to vector<8x32xbf16>
    %c0_1 = arith.constant 0 : index
    %c0_2 = arith.constant 0 : index
    %2 = vector.load %arg2[%c0_1, %c0_2] : memref<32x128xbf16, #tpu.memory_space<vmem>>, vector<32x128xbf16>
    %cst = arith.constant dense<0.000000e+00> : vector<8x128xf32>
    %3 = tpu.matmul %1, %2, %cst {dimension_numbers = #tpu.dot_dimension_numbers<[1], [0], [0], [1], [0, 0, 1, 1], [], []>} : vector<8x32xbf16>, vector<32x128xbf16>, vector<8x128xf32> -> vector<8x128xf32>
    %c0_3 = arith.constant 0 : index
    %c0_4 = arith.constant 0 : index
    %4 = vector.load %arg3[%c0_3, %c0_4] : memref<1x128xf32, #tpu.memory_space<vmem>>, vector<1x128xf32>
    %5 = vector.broadcast %4 : vector<1x128xf32> to vector<8x128xf32>
    %6 = arith.addf %3, %5 : vector<8x128xf32>
    %7 = math.absf %6 : vector<8x128xf32>
    %cst_5 = arith.constant 0.000000e+00 : f32
    %8 = vector.broadcast %cst_5 : f32 to vector<8x128xf32>
    %9 = arith.subf %8, %7 : vector<8x128xf32>
    %10 = math.exp %9 : vector<8x128xf32>
    %cst_6 = arith.constant 2.000000e+00 : f32
    %11 = vector.broadcast %cst_6 : f32 to vector<8x128xf32>
    %12 = arith.addf %10, %11 : vector<8x128xf32>
    %13 = arith.mulf %10, %12 : vector<8x128xf32>
    %cst_7 = arith.constant 0.000000e+00 : f32
    %14 = vector.broadcast %cst_7 : f32 to vector<8x128xf32>
    %15 = arith.cmpf oge, %6, %14 : vector<8x128xf32>
    %cst_8 = arith.constant 2.000000e+00 : f32
    %16 = vector.broadcast %cst_8 : f32 to vector<8x128xf32>
    %17 = arith.mulf %16, %10 : vector<8x128xf32>
    %cst_9 = arith.constant 1.000000e+00 : f32
    %18 = vector.broadcast %cst_9 : f32 to vector<8x128xf32>
    %19 = arith.addf %17, %18 : vector<8x128xf32>
    %20 = arith.select %15, %19, %13 : vector<8x128xi1>, vector<8x128xf32>
    %cst_10 = arith.constant 2.000000e+00 : f32
    %21 = vector.broadcast %cst_10 : f32 to vector<8x128xf32>
    %22 = arith.mulf %21, %10 : vector<8x128xf32>
    %23 = arith.mulf %22, %10 : vector<8x128xf32>
    %cst_11 = arith.constant 2.000000e+00 : f32
    %24 = vector.broadcast %cst_11 : f32 to vector<8x128xf32>
    %25 = arith.mulf %24, %10 : vector<8x128xf32>
    %26 = arith.addf %23, %25 : vector<8x128xf32>
    %cst_12 = arith.constant 1.000000e+00 : f32
    %27 = vector.broadcast %cst_12 : f32 to vector<8x128xf32>
    %28 = arith.addf %26, %27 : vector<8x128xf32>
    %cst_13 = arith.constant 2.000000e+00 : f32
    %29 = vector.broadcast %cst_13 : f32 to vector<8x128xf32>
    %30 = arith.addf %13, %29 : vector<8x128xf32>
    %31 = arith.select %15, %28, %30 : vector<8x128xi1>, vector<8x128xf32>
    %32 = arith.mulf %6, %20 : vector<8x128xf32>
    %33 = tpu.reciprocal %31 {approx = true} : vector<8x128xf32> -> vector<8x128xf32>
    %34 = arith.mulf %32, %33 : vector<8x128xf32>
    %c0_14 = arith.constant 0 : index
    %c0_15 = arith.constant 0 : index
    %35 = vector.load %arg4[%c0_14, %c0_15] : memref<8x128xf32, #tpu.memory_space<vmem>>, vector<8x128xf32>
    tpu.vector_store %arg4[%c0_14, %c0_15], %34 {strides = array<i32>} : memref<8x128xf32, #tpu.memory_space<vmem>>, vector<8x128xf32>,
    return
  }
  func.func @transform_0(%arg0: i32) -> (i32, i32) {
    %c0_i32 = arith.constant 0 : i32
    %c0_i32_0 = arith.constant 0 : i32
    return %arg0, %c0_i32 : i32, i32
  }
  func.func @transform_1(%arg0: i32) -> (i32, i32) {
    %c0_i32 = arith.constant 0 : i32
    %c0_i32_0 = arith.constant 0 : i32
    %c0_i32_1 = arith.constant 0 : i32
    return %c0_i32, %c0_i32_0 : i32, i32
  }
  func.func @transform_2(%arg0: i32) -> (i32, i32) {
    %c0_i32 = arith.constant 0 : i32
    %c0_i32_0 = arith.constant 0 : i32
    %c0_i32_1 = arith.constant 0 : i32
    return %c0_i32, %c0_i32_0 : i32, i32
  }
  func.func @transform_3(%arg0: i32) -> (i32, i32) {
    %c0_i32 = arith.constant 0 : i32
    %c0_i32_0 = arith.constant 0 : i32
    return %arg0, %c0_i32 : i32, i32
  }
}

</mosaic_0001>

<llo_original>
// kernel: tpu_custom_call.1
$region0: #{tpu_custom_call.1}
  #allocation0 [shape = 'u32[]', space=smem, size = 0x4, offset = 0x4, fixed_abs, tag = 'smem constant byte address 0x4 - core index']
  #allocation1 [shape = 'u32[144,128]{1,0:T(1,128)}', space=vmem, size = 0x12000, scoped, tag = 'internal scratch']
  %s0 = inlined_call_operand.hbm [shape: f32[8,32], index: 0, kind: input, shape index: {}]
  %s1 = inlined_call_operand.hbm [shape: bf16[32,128], index: 1, kind: input, shape index: {}]
  %s2 = inlined_call_operand.vmem [shape: f32[1,128], index: 2, kind: input, shape index: {}]
  %s3 = inlined_call_operand.hbm [shape: f32[8,128], index: 3, kind: output, shape index: {}]
  %s4 = sld [smem:[#allocation0]]
  $region30: #{tpu_custom_call.1} parent=0
    _
  %s6 = ssub.s32 1, %s4
  %s7 = scalar_select 0, %s6, %s4
  $region1: #{tpu_custom_call.1} parent=0
    #allocation2 [shape = 'u8[4096]{0}', space=vmem, size = 0x1000, scoped, tag = 'input window, operand 0, single buffered']
    #allocation3 [shape = 's32[1]{0}', space=sflag, size = 0x4, scoped, tag = 'scoped memory for tpu_custom_call.1']
    #allocation4 [shape = 's32[1]{0}', space=sflag, size = 0x4, scoped, tag = 'scoped memory for tpu_custom_call.1']
    #allocation5 [shape = 'u8[8192]{0}', space=vmem, size = 0x2000, scoped, tag = 'input window, operand 1, single buffered']
    #allocation6 [shape = 's32[1]{0}', space=sflag, size = 0x4, scoped, tag = 'scoped memory for tpu_custom_call.1']
    #allocation7 [shape = 'u8[4096]{0}', space=vmem, size = 0x1000, scoped, tag = 'output window, operand 0, single buffered']
    %8 = vsyncpa [#allocation3], 0
    %9 = vsyncpa [#allocation6], 0
    %10 = vsyncpa [#allocation4], 0
    // Predicated region
    $region2: #{tpu_custom_call.1} parent=1 // pred_check
      _
    $region3: #{tpu_custom_call.1} parent=1 // pred_check_branch
      %12 = sbr.rel (0) target = $region5
    $region4: #{tpu_custom_call.1} parent=1 // pred_region
      %s14 = ssub.s32 128, 128
      %15 = vsyncadd [#allocation3], %s14
      %s17 = sshll.u32 [#allocation2], 4
      %s18 = int_to_ptr.vmem [resolvable:$true] %s17
      %20 = dma.hbm_to_vmem [thread:$0]  %s0, 128, %s18, [#allocation3]
    $region5: #{tpu_custom_call.1} parent=1 // pred_fallthru
      _
    // Predicated region
    $region6: #{tpu_custom_call.1} parent=1 // pred_check
      _
    $region7: #{tpu_custom_call.1} parent=1 // pred_check_branch
      %22 = sbr.rel (0) target = $region9
    $region8: #{tpu_custom_call.1} parent=1 // pred_region
      %s24 = ssub.s32 256, 256
      %25 = vsyncadd [#allocation6], %s24
      %s26 = sshll.u32 [#allocation5], 4
      %s27 = int_to_ptr.vmem [resolvable:$true] %s26
      %32 = dma.hbm_to_vmem [thread:$0]  %s1, 256, %s27, [#allocation6], 64, 64, 4
    $region9: #{tpu_custom_call.1} parent=1 // pred_fallthru
      _
    // Predicated region
    $region10: #{tpu_custom_call.1} parent=1 // pred_check
      _
    $region11: #{tpu_custom_call.1} parent=1 // pred_check_branch
      %34 = sbr.rel (0) target = $region13
    $region12: #{tpu_custom_call.1} parent=1 // pred_region
      _
    $region13: #{tpu_custom_call.1} parent=1 // pred_fallthru
      _
    // Predicated region
    $region14: #{tpu_custom_call.1} parent=1 // pred_check
      _
    $region15: #{tpu_custom_call.1} parent=1 // pred_check_branch
      %36 = sbr.rel (0) target = $region17
    $region16: #{tpu_custom_call.1} parent=1 // pred_region
      %37 = dma.done [#allocation3], 128
    $region17: #{tpu_custom_call.1} parent=1 // pred_fallthru
      _
    // Predicated region
    $region18: #{tpu_custom_call.1} parent=1 // pred_check
      _
    $region19: #{tpu_custom_call.1} parent=1 // pred_check_branch
      %39 = sbr.rel (0) target = $region21
    $region20: #{tpu_custom_call.1} parent=1 // pred_region
      %40 = dma.done [#allocation6], 256
    $region21: #{tpu_custom_call.1} parent=1 // pred_fallthru
      _
    %v42 = vld [vmem:[#allocation2] sm:$0xff]
    %v43 = vpack.c.bf16 %v42, %v42
    %v44 = vld [vmem:[#allocation5] sm:$0xf]
    %v45 = vld [vmem:[#allocation5 + $0x4] sm:$0xf]
    %v46 = vld [vmem:[#allocation5 + $0x8] sm:$0xf]
    %v47 = vld [vmem:[#allocation5 + $0xc] sm:$0xf]
    %v48 = vld [vmem:[%s2] sm:$0x1]
    %v50 = vlaneseq
    %v51 = vshrl.u32 %v50, 7
    %v52 = vsub.s32 0, %v51
    %v53 = vrot.slane %v48, %v52
    %v59 = vunpack.c.l.b16 %v44
    %v60 = vunpack.c.l.b16 %v45
    %v61 = vunpack.c.l.b16 %v46
    %v62 = vunpack.c.l.b16 %v47
    %v63 = vpack.c.b16 %v60, %v59
    %v64 = vpack.c.b16 %v62, %v61
    %vm67 = vcmask 261120
    %v69 = vsel %vm67, %v43, 0
    %71 = vmatprep.subr.bf16.mxu0 0
    %72 = vmatpush1.bf16.msra.mxu0 %v63
    %73 = vmatprep.subr.bf16.mxu0 0
    %74 = vmatpush1.bf16.msra.mxu0 %v64
    %75 = vmatprep.subr.bf16.mxu0 0
    %76 = vmatpush1.bf16.msra.mxu0 0
    %77 = vmatprep.subr.bf16.mxu0 0
    %78 = vmatpush1.bf16.msra.mxu0 0
    %79 = vmatprep.subr.bf16.mxu0 0
    %80 = vmatpush1.bf16.msra.mxu0 0
    %81 = vmatprep.subr.bf16.mxu0 0
    %82 = vmatpush1.bf16.msra.mxu0 0
    %83 = vmatprep.subr.bf16.mxu0 0
    %84 = vmatpush1.bf16.msra.mxu0 0
    %85 = vmatprep.subr.bf16.mxu0 0
    %86 = vmatpush1.bf16.msra.mxu0 0
    %87 = vmatprep.subr.bf16.mxu0 0
    %88 = vmatpush1.bf16.msra.mxu0 0
    %89 = vmatprep.subr.bf16.mxu0 0
    %90 = vmatpush1.bf16.msra.mxu0 0
    %91 = vmatprep.subr.bf16.mxu0 0
    %92 = vmatpush1.bf16.msra.mxu0 0
    %93 = vmatprep.subr.bf16.mxu0 0
    %94 = vmatpush1.bf16.msra.mxu0 0
    %95 = vmatprep.subr.bf16.mxu0 0
    %96 = vmatpush1.bf16.msra.mxu0 0
    %97 = vmatprep.subr.bf16.mxu0 0
    %98 = vmatpush1.bf16.msra.mxu0 0
    %99 = vmatprep.subr.bf16.mxu0 0
    %100 = vmatpush1.bf16.msra.mxu0 0
    %101 = vmatprep.subr.bf16.mxu0 0
    %102 = vmatpush1.bf16.msra.mxu0 0
    %103 = vmatprep.mubr.bf16.mxu0 0
    %104 = vmatmul.mubr.bf16.gmra.mrb[0].mxu0 %v69
    %v105 = vpop.f32.mrb[0].mxu0
    %v106 = vadd.f32 %v53, %v105
    %v107 = vpop.f32.mrb[0].mxu0
    %v108 = vpop.f32.mrb[0].mxu0
    %v109 = vpop.f32.mrb[0].mxu0
    %110 = vdwg.mxu0
    %v111 = vand.u32 2147483647, %v106
    %v112 = vsub.f32 0.0, %v111
    %v113 = vmul.f32 %v112, 1.442695
    %v114 = vpow.pop %v113
    %v115 = vadd.f32 %v114, 2.0
    %v116 = vmul.f32 %v114, %v115
    %vm117 = vcmp.ge.f32.partialorder %v106, 0.0
    %v118 = vmul.f32 %v114, 2.0
    %v119 = vadd.f32 %v118, 1.0
    %v120 = vsel %vm117, %v119, %v116
    %v121 = vmul.f32 %v118, %v114
    %v122 = vadd.f32 %v121, %v118
    %v123 = vadd.f32 %v122, 1.0
    %v124 = vadd.f32 %v116, 2.0
    %v125 = vsel %vm117, %v123, %v124
    %v126 = vmul.f32 %v106, %v120
    %v127 = vrcp.pop %v125
    %v128 = vmul.f32 %v126, %v127
    %129 = vst [vmem:[#allocation7] sm:$0xff] %v128
    // Predicated region
    $region22: #{tpu_custom_call.1} parent=1 // pred_check
      _
    $region23: #{tpu_custom_call.1} parent=1 // pred_check_branch
      %131 = sbr.rel (0) target = $region25
    $region24: #{tpu_custom_call.1} parent=1 // pred_region
      %s133 = ssub.s32 128, 128
      %134 = vsyncadd [#allocation4], %s133
      %s136 = sshll.u32 [#allocation7], 4
      %s137 = int_to_ptr.vmem [resolvable:$true] %s136
      %139 = dma.vmem_to_hbm [thread:$0]  %s137, 128, %s3, [#allocation4]
    $region25: #{tpu_custom_call.1} parent=1 // pred_fallthru
      _
    // Predicated region
    $region26: #{tpu_custom_call.1} parent=1 // pred_check
      _
    $region27: #{tpu_custom_call.1} parent=1 // pred_check_branch
      %141 = sbr.rel (0) target = $region29
    $region28: #{tpu_custom_call.1} parent=1 // pred_region
      %142 = dma.done [#allocation4], 128
    $region29: #{tpu_custom_call.1} parent=1 // pred_fallthru
      _
    %143 = vsyncpa [#allocation3], 1
    %144 = vsyncpa [#allocation6], 1
    %145 = vsyncpa [#allocation4], 1

// kernel: tpu_custom_call.1
$region0: #{tpu_custom_call.1}
  #allocation0 [shape = 'u32[]', space=smem, size = 0x4, offset = 0x4, fixed_abs, tag = 'smem constant byte address 0x4 - core index']
  #allocation1 [shape = 'u32[144,128]{1,0:T(1,128)}', space=vmem, size = 0x12000, scoped, tag = 'internal scratch']
  %s0 = inlined_call_operand.hbm [shape: f32[8,32], index: 0, kind: input, shape index: {}]
  %s1 = inlined_call_operand.hbm [shape: bf16[32,128], index: 1, kind: input, shape index: {}]
  %s2 = inlined_call_operand.vmem [shape: f32[1,128], index: 2, kind: input, shape index: {}]
  %s3 = inlined_call_operand.hbm [shape: f32[8,128], index: 3, kind: output, shape index: {}]
  %s4 = sld [smem:[#allocation0]]
  $region30: #{tpu_custom_call.1} parent=0
    _
  %s6 = ssub.s32 1, %s4
  %s7 = scalar_select 0, %s6, %s4
  $region1: #{tpu_custom_call.1} parent=0
    #allocation2 [shape = 'u8[4096]{0}', space=vmem, size = 0x1000, scoped, tag = 'input window, operand 0, single buffered']
    #allocation3 [shape = 's32[1]{0}', space=sflag, size = 0x4, scoped, tag = 'scoped memory for tpu_custom_call.1']
    #allocation4 [shape = 's32[1]{0}', space=sflag, size = 0x4, scoped, tag = 'scoped memory for tpu_custom_call.1']
    #allocation5 [shape = 'u8[8192]{0}', space=vmem, size = 0x2000, scoped, tag = 'input window, operand 1, single buffered']
    #allocation6 [shape = 's32[1]{0}', space=sflag, size = 0x4, scoped, tag = 'scoped memory for tpu_custom_call.1']
    #allocation7 [shape = 'u8[4096]{0}', space=vmem, size = 0x1000, scoped, tag = 'output window, operand 0, single buffered']
    %8 = vsyncpa [#allocation3], 0
    %9 = vsyncpa [#allocation6], 0
    %10 = vsyncpa [#allocation4], 0
    // Predicated region
    $region2: #{tpu_custom_call.1} parent=1 // pred_check
      _
    $region3: #{tpu_custom_call.1} parent=1 // pred_check_branch
      %12 = sbr.rel (0) target = $region5
    $region4: #{tpu_custom_call.1} parent=1 // pred_region
      %s14 = ssub.s32 128, 128
      %15 = vsyncadd [#allocation3], %s14
      %s17 = sshll.u32 [#allocation2], 4
      %s18 = int_to_ptr.vmem [resolvable:$true] %s17
      %20 = dma.hbm_to_vmem [thread:$0]  %s0, 128, %s18, [#allocation3]
    $region5: #{tpu_custom_call.1} parent=1 // pred_fallthru
      _
    // Predicated region
    $region6: #{tpu_custom_call.1} parent=1 // pred_check
      _
    $region7: #{tpu_custom_call.1} parent=1 // pred_check_branch
      %22 = sbr.rel (0) target = $region9
    $region8: #{tpu_custom_call.1} parent=1 // pred_region
      %s24 = ssub.s32 256, 256
      %25 = vsyncadd [#allocation6], %s24
      %s26 = sshll.u32 [#allocation5], 4
      %s27 = int_to_ptr.vmem [resolvable:$true] %s26
      %32 = dma.hbm_to_vmem [thread:$0]  %s1, 256, %s27, [#allocation6], 64, 64, 4
    $region9: #{tpu_custom_call.1} parent=1 // pred_fallthru
      _
    // Predicated region
    $region10: #{tpu_custom_call.1} parent=1 // pred_check
      _
    $region11: #{tpu_custom_call.1} parent=1 // pred_check_branch
      %34 = sbr.rel (0) target = $region13
    $region12: #{tpu_custom_call.1} parent=1 // pred_region
      _
    $region13: #{tpu_custom_call.1} parent=1 // pred_fallthru
      _
    // Predicated region
    $region14: #{tpu_custom_call.1} parent=1 // pred_check
      _
    $region15: #{tpu_custom_call.1} parent=1 // pred_check_branch
      %36 = sbr.rel (0) target = $region17
    $region16: #{tpu_custom_call.1} parent=1 // pred_region
      %37 = dma.done [#allocation3], 128
    $region17: #{tpu_custom_call.1} parent=1 // pred_fallthru
      _
    // Predicated region
    $region18: #{tpu_custom_call.1} parent=1 // pred_check
      _
    $region19: #{tpu_custom_call.1} parent=1 // pred_check_branch
      %39 = sbr.rel (0) target = $region21
    $region20: #{tpu_custom_call.1} parent=1 // pred_region
      %40 = dma.done [#allocation6], 256
    $region21: #{tpu_custom_call.1} parent=1 // pred_fallthru
      _
    %v42 = vld [vmem:[#allocation2] sm:$0xff]
    %v43 = vpack.c.bf16 %v42, %v42
    %v44 = vld [vmem:[#allocation5] sm:$0xf]
    %v45 = vld [vmem:[#allocation5 + $0x4] sm:$0xf]
    %v46 = vld [vmem:[#allocation5 + $0x8] sm:$0xf]
    %v47 = vld [vmem:[#allocation5 + $0xc] sm:$0xf]
    %v48 = vld [vmem:[%s2] sm:$0x1]
    %v50 = vlaneseq
    %v51 = vshrl.u32 %v50, 7
    %v52 = vsub.s32 0, %v51
    %v53 = vrot.slane %v48, %v52
    %v59 = vunpack.c.l.b16 %v44
    %v60 = vunpack.c.l.b16 %v45
    %v61 = vunpack.c.l.b16 %v46
    %v62 = vunpack.c.l.b16 %v47
    %v63 = vpack.c.b16 %v60, %v59
    %v64 = vpack.c.b16 %v62, %v61
    %vm67 = vcmask 261120
    %v69 = vsel %vm67, %v43, 0
    %71 = vmatprep.subr.bf16.mxu0 0
    %72 = vmatpush1.bf16.msra.mxu0 %v63
    %73 = vmatprep.subr.bf16.mxu0 0
    %74 = vmatpush1.bf16.msra.mxu0 %v64
    %75 = vmatprep.subr.bf16.mxu0 0
    %76 = vmatpush1.bf16.msra.mxu0 0
    %77 = vmatprep.subr.bf16.mxu0 0
    %78 = vmatpush1.bf16.msra.mxu0 0
    %79 = vmatprep.subr.bf16.mxu0 0
    %80 = vmatpush1.bf16.msra.mxu0 0
    %81 = vmatprep.subr.bf16.mxu0 0
    %82 = vmatpush1.bf16.msra.mxu0 0
    %83 = vmatprep.subr.bf16.mxu0 0
    %84 = vmatpush1.bf16.msra.mxu0 0
    %85 = vmatprep.subr.bf16.mxu0 0
    %86 = vmatpush1.bf16.msra.mxu0 0
    %87 = vmatprep.subr.bf16.mxu0 0
    %88 = vmatpush1.bf16.msra.mxu0 0
    %89 = vmatprep.subr.bf16.mxu0 0
    %90 = vmatpush1.bf16.msra.mxu0 0
    %91 = vmatprep.subr.bf16.mxu0 0
    %92 = vmatpush1.bf16.msra.mxu0 0
    %93 = vmatprep.subr.bf16.mxu0 0
    %94 = vmatpush1.bf16.msra.mxu0 0
    %95 = vmatprep.subr.bf16.mxu0 0
    %96 = vmatpush1.bf16.msra.mxu0 0
    %97 = vmatprep.subr.bf16.mxu0 0
    %98 = vmatpush1.bf16.msra.mxu0 0
    %99 = vmatprep.subr.bf16.mxu0 0
    %100 = vmatpush1.bf16.msra.mxu0 0
    %101 = vmatprep.subr.bf16.mxu0 0
    %102 = vmatpush1.bf16.msra.mxu0 0
    %103 = vmatprep.mubr.bf16.mxu0 0
    %104 = vmatmul.mubr.bf16.gmra.mrb[0].mxu0 %v69
    %v105 = vpop.f32.mrb[0].mxu0
    %v106 = vadd.f32 %v53, %v105
    %v107 = vpop.f32.mrb[0].mxu0
    %v108 = vpop.f32.mrb[0].mxu0
    %v109 = vpop.f32.mrb[0].mxu0
    %110 = vdwg.mxu0
    %v111 = vand.u32 2147483647, %v106
    %v112 = vsub.f32 0.0, %v111
    %v113 = vmul.f32 %v112, 1.442695
    %v114 = vpow.pop %v113
    %v115 = vadd.f32 %v114, 2.0
    %v116 = vmul.f32 %v114, %v115
    %vm117 = vcmp.ge.f32.partialorder %v106, 0.0
    %v118 = vmul.f32 %v114, 2.0
    %v119 = vadd.f32 %v118, 1.0
    %v120 = vsel %vm117, %v119, %v116
    %v121 = vmul.f32 %v118, %v114
    %v122 = vadd.f32 %v121, %v118
    %v123 = vadd.f32 %v122, 1.0
    %v124 = vadd.f32 %v116, 2.0
    %v125 = vsel %vm117, %v123, %v124
    %v126 = vmul.f32 %v106, %v120
    %v127 = vrcp.pop %v125
    %v128 = vmul.f32 %v126, %v127
    %129 = vst [vmem:[#allocation7] sm:$0xff] %v128
    // Predicated region
    $region22: #{tpu_custom_call.1} parent=1 // pred_check
      _
    $region23: #{tpu_custom_call.1} parent=1 // pred_check_branch
      %131 = sbr.rel (0) target = $region25
    $region24: #{tpu_custom_call.1} parent=1 // pred_region
      %s133 = ssub.s32 128, 128
      %134 = vsyncadd [#allocation4], %s133
      %s136 = sshll.u32 [#allocation7], 4
      %s137 = int_to_ptr.vmem [resolvable:$true] %s136
      %139 = dma.vmem_to_hbm [thread:$0]  %s137, 128, %s3, [#allocation4]
    $region25: #{tpu_custom_call.1} parent=1 // pred_fallthru
      _
    // Predicated region
    $region26: #{tpu_custom_call.1} parent=1 // pred_check
      _
    $region27: #{tpu_custom_call.1} parent=1 // pred_check_branch
      %141 = sbr.rel (0) target = $region29
    $region28: #{tpu_custom_call.1} parent=1 // pred_region
      %142 = dma.done [#allocation4], 128
    $region29: #{tpu_custom_call.1} parent=1 // pred_fallthru
      _
    %143 = vsyncpa [#allocation3], 1
    %144 = vsyncpa [#allocation6], 1
    %145 = vsyncpa [#allocation4], 1

</llo_original>
